<compile_context>
chip_gen: v7x
topology: tpu7x:2x2x1
jax: 0.10.0
libtpu: 0.0.40
codegen_flags: <defaults>
</compile_context>

<pallas_src>
import functools

import jax
import jax.numpy as jnp
from jax.experimental import pallas as pl
from jax.experimental.pallas import tpu as pltpu


def _round_up(x, m):
    return (x + m - 1) // m * m


def _decoder_class_kernel(za_ref, zb_ref, p_ref, out_ref, *, H, L, C, w_off, b_off):
    """Whole forward pass for one batch tile; everything lives in VMEM.

    torch.cat([a, b], dim=1) @ W is rewritten as a @ W[:Ha] + b @ W[Ha:], which avoids
    lane concatenation inside the kernel. All parameter slices are static views of the
    packed slab (zero runtime cost).
    """
    za = za_ref[...]            # (Bt, H)
    zb = zb_ref[...]            # (Bt, H)

    def mm(a, w):
        return jnp.dot(a, w, preferred_element_type=jnp.float32)

    def bias(i, n):
        row = b_off + 8 * i     # each bias sits in its own sublane-aligned 8-row block
        return p_ref[row:row + 1, 0:n]   # (1, n) broadcasts over the batch tile

    o1, o2, o3, o4, o5 = w_off

    # layer 1: ReLU(Linear(H -> L)(za))
    x1 = jnp.maximum(mm(za, p_ref[o1:o1 + H, 0:L]) + bias(0, L), 0.0)

    # layer 2: ReLU(Linear(H+L -> L)(cat(zb, x1)))
    x2 = jnp.maximum(mm(zb, p_ref[o2:o2 + H, 0:L])
                     + mm(x1, p_ref[o2 + H:o2 + H + L, 0:L])
                     + bias(1, L), 0.0)

    # layer 3: ReLU(Linear(H+L -> L)(cat(za, x2)))
    x3 = jnp.maximum(mm(za, p_ref[o3:o3 + H, 0:L])
                     + mm(x2, p_ref[o3 + H:o3 + H + L, 0:L])
                     + bias(2, L), 0.0)

    # layer 4: ReLU(Linear(H+L -> L)(cat(zb, x3)))
    x4 = jnp.maximum(mm(zb, p_ref[o4:o4 + H, 0:L])
                     + mm(x3, p_ref[o4 + H:o4 + H + L, 0:L])
                     + bias(3, L), 0.0)

    # last_fc: Linear(4L -> C)(cat(x1, x2, x3, x4))
    pred = (mm(x1, p_ref[o5 + 0 * L:o5 + 1 * L, 0:C])
            + mm(x2, p_ref[o5 + 1 * L:o5 + 2 * L, 0:C])
            + mm(x3, p_ref[o5 + 2 * L:o5 + 3 * L, 0:C])
            + mm(x4, p_ref[o5 + 3 * L:o5 + 4 * L, 0:C])
            + bias(4, C))

    out_ref[...] = pred.astype(out_ref.dtype)


def pack_params(params, *, half_width, layer_width, num_class):
    """Pack (w1,b1,...,w5,b5) into one f32 slab [total_rows, max(L, C)].

    Each weight block is padded to a multiple of 8 rows so every in-kernel slice starts
    at a sublane-aligned offset; each bias gets its own 8-row block.
    Returns (slab, weight_row_offsets, bias_base_row).
    """
    L, C = layer_width, num_class
    w1, b1, w2, b2, w3, b3, w4, b4, w5, b5 = params
    wcol = max(L, C)

    blocks, w_off, cur = [], [], 0
    for w in (w1, w2, w3, w4, w5):
        r, c = w.shape
        rp = _round_up(r, 8)
        blk = jnp.zeros((rp, wcol), jnp.float32).at[:r, :c].set(w.astype(jnp.float32))
        blocks.append(blk)
        w_off.append(cur)
        cur += rp

    b_off = cur
    for b in (b1, b2, b3, b4, b5):
        n = b.shape[-1]
        blk = jnp.zeros((8, wcol), jnp.float32).at[0, :n].set(
            jnp.reshape(b, (-1,)).astype(jnp.float32))
        blocks.append(blk)
        cur += 8

    slab = jnp.concatenate(blocks, axis=0)
    return slab, tuple(w_off), b_off


def decoder_class_forward(z, params, *, half_width, layer_width, num_class,
                          batch_tile=None):
    """params = (w1, b1, ..., w5, b5); weights stored (in_features, out_features)."""
    H, L, C = half_width, layer_width, num_class
    B = z.shape[0]

    slab, w_off, b_off = pack_params(params, half_width=H, layer_width=L, num_class=C)

    # Pre-split z host-side: hands the kernel two lane-aligned MXU operands (no
    # intra-vreg lane slicing inside the kernel).
    za = z[:, 0:H]
    zb = z[:, H:2 * H]

    if batch_tile is None:
        batch_tile = B if B <= 256 else 256
    if (B % batch_tile != 0) or (batch_tile != B and batch_tile % 8 != 0):
        batch_tile = B               # single full-batch block fallback
    grid = (B // batch_tile,)

    kernel = functools.partial(_decoder_class_kernel,
                               H=H, L=L, C=C, w_off=w_off, b_off=b_off)

    flops = 2 * B * (H * L + 3 * (H + L) * L + 4 * L * C)
    bytes_accessed = 4 * (za.size + zb.size + slab.size + B * C)
    cost = pl.CostEstimate(flops=flops, transcendentals=0,
                           bytes_accessed=bytes_accessed)

    return pl.pallas_call(
        kernel,
        out_shape=jax.ShapeDtypeStruct((B, C), jnp.float32),
        grid_spec=pltpu.PrefetchScalarGridSpec(
            num_scalar_prefetch=0,
            grid=grid,
            in_specs=[
                pl.BlockSpec((batch_tile, H), lambda i: (i, 0)),   # za tile
                pl.BlockSpec((batch_tile, H), lambda i: (i, 0)),   # zb tile
                pl.BlockSpec(tuple(slab.shape), lambda i: (0, 0)), # params: VMEM-resident
            ],
            out_specs=pl.BlockSpec((batch_tile, C), lambda i: (i, 0)),
        ),
        compiler_params=pltpu.CompilerParams(
            dimension_semantics=("parallel",)),
        cost_estimate=cost,
    )(za, zb, slab)


def init_params(key, *, half_width, layer_width, num_class):
    """Deterministic init mimicking nn.Linear default (uniform +-1/sqrt(fan_in)).

    Weights returned already transposed to (in_features, out_features);
    biases shaped (1, out_features).
    """
    H, L, C = half_width, layer_width, num_class
    dims = [(H, L), (H + L, L), (H + L, L), (H + L, L), (4 * L, C)]
    params = []
    for (fan_in, fan_out) in dims:
        key, kw, kb = jax.random.split(key, 3)
        bound = 1.0 / jnp.sqrt(jnp.float32(fan_in))
        w = jax.random.uniform(kw, (fan_in, fan_out), jnp.float32, -bound, bound)
        b = jax.random.uniform(kb, (1, fan_out), jnp.float32, -bound, bound)
        params += [w, b]
    return tuple(params)


def reference_forward(z, params, *, half_width, layer_width):
    """Pure-JAX reference mirroring the PyTorch forward (eval mode)."""
    H, L = half_width, layer_width
    w1, b1, w2, b2, w3, b3, w4, b4, w5, b5 = params
    za = z[:, 0:H]
    zb = z[:, H:2 * H]
    x1 = jnp.maximum(za @ w1 + b1, 0.0)
    x2 = jnp.maximum(jnp.concatenate([zb, x1], 1) @ w2 + b2, 0.0)
    x3 = jnp.maximum(jnp.concatenate([za, x2], 1) @ w3 + b3, 0.0)
    x4 = jnp.maximum(jnp.concatenate([zb, x3], 1) @ w4 + b4, 0.0)
    x = jnp.concatenate([x1, x2, x3, x4], 1)
    return x @ w5 + b5


if __name__ == "__main__":
    # Constructor: Decoder_Class(half_width=16, layer_width=32, num_class=10)
    #   -> self.layer_width = 16, self.Half_width = 32
    HALF_WIDTH_ARG = 16   # becomes self.layer_width
    LAYER_WIDTH_ARG = 32  # becomes self.Half_width
    NUM_CLASS = 10

    H = LAYER_WIDTH_ARG   # self.Half_width
    L = HALF_WIDTH_ARG    # self.layer_width
    B = 8

    key = jax.random.PRNGKey(0)
    key, kz = jax.random.split(key)
    z = jax.random.normal(kz, (B, 2 * H), jnp.float32)

    params = init_params(key, half_width=H, layer_width=L, num_class=NUM_CLASS)

    pred = decoder_class_forward(z, params,
                                 half_width=H, layer_width=L, num_class=NUM_CLASS)
    pred = jax.block_until_ready(pred)

    ref = reference_forward(z, params, half_width=H, layer_width=L)
    assert pred.shape == (B, NUM_CLASS)
    assert jnp.allclose(pred, ref, atol=1e-5, rtol=1e-5), "mismatch vs JAX reference"

    print("KERNEL_OK")
</pallas_src>

<mosaic_0001>
module attributes {stable_mosaic.version = 11 : i64} {
  func.func @_decoder_class_kernel(%arg0: i32, %arg1: memref<8x32xf32, #tpu.memory_space<vmem>>, %arg2: memref<8x32xf32, #tpu.memory_space<vmem>>, %arg3: memref<280x16xf32, #tpu.memory_space<vmem>>, %arg4: memref<8x10xf32, #tpu.memory_space<vmem>>) attributes {dimension_semantics = [#tpu.dimension_semantics<parallel>], iteration_bounds = array<i64: 1>, scalar_prefetch = 0 : i64, scratch_operands = 0 : i64, tpu.core_type = #tpu.core_type<tc>, window_params = [{transform_indices = @transform_0, window_bounds = array<i64: 8, 32>}, {transform_indices = @transform_1, window_bounds = array<i64: 8, 32>}, {pipeline_mode = #tpu.pipeline_mode<synchronous>, transform_indices = @transform_2, window_bounds = array<i64: 280, 16>}, {transform_indices = @transform_3, window_bounds = array<i64: 8, 10>}]} {
    %c0 = arith.constant 0 : index
    %c0_0 = arith.constant 0 : index
    %0 = vector.load %arg1[%c0, %c0_0] : memref<8x32xf32, #tpu.memory_space<vmem>>, vector<8x32xf32>
    %c0_1 = arith.constant 0 : index
    %c0_2 = arith.constant 0 : index
    %1 = vector.load %arg2[%c0_1, %c0_2] : memref<8x32xf32, #tpu.memory_space<vmem>>, vector<8x32xf32>
    %c0_3 = arith.constant 0 : index
    %c0_4 = arith.constant 0 : index
    %2 = vector.load %arg3[%c0_3, %c0_4] : memref<280x16xf32, #tpu.memory_space<vmem>>, vector<32x16xf32>
    %cst = arith.constant dense<0.000000e+00> : vector<8x16xf32>
    %3 = tpu.matmul %0, %2, %cst {dimension_numbers = #tpu.dot_dimension_numbers<[1], [0], [0], [1], [0, 0, 1, 1], [], []>} : vector<8x32xf32>, vector<32x16xf32>, vector<8x16xf32> -> vector<8x16xf32>
    %c240 = arith.constant 240 : index
    %c0_5 = arith.constant 0 : index
    %4 = vector.load %arg3[%c240, %c0_5] : memref<280x16xf32, #tpu.memory_space<vmem>>, vector<1x16xf32>
    %5 = vector.broadcast %4 : vector<1x16xf32> to vector<8x16xf32>
    %6 = arith.addf %3, %5 : vector<8x16xf32>
    %cst_6 = arith.constant 0.000000e+00 : f32
    %7 = vector.broadcast %cst_6 : f32 to vector<8x16xf32>
    %8 = arith.maximumf %6, %7 : vector<8x16xf32>
    %c32 = arith.constant 32 : index
    %c0_7 = arith.constant 0 : index
    %9 = vector.load %arg3[%c32, %c0_7] : memref<280x16xf32, #tpu.memory_space<vmem>>, vector<32x16xf32>
    %cst_8 = arith.constant dense<0.000000e+00> : vector<8x16xf32>
    %10 = tpu.matmul %1, %9, %cst_8 {dimension_numbers = #tpu.dot_dimension_numbers<[1], [0], [0], [1], [0, 0, 1, 1], [], []>} : vector<8x32xf32>, vector<32x16xf32>, vector<8x16xf32> -> vector<8x16xf32>
    %c64 = arith.constant 64 : index
    %c0_9 = arith.constant 0 : index
    %11 = vector.load %arg3[%c64, %c0_9] : memref<280x16xf32, #tpu.memory_space<vmem>>, vector<16x16xf32>
    %cst_10 = arith.constant dense<0.000000e+00> : vector<8x16xf32>
    %12 = tpu.matmul %8, %11, %cst_10 {dimension_numbers = #tpu.dot_dimension_numbers<[1], [0], [0], [1], [0, 0, 1, 1], [], []>} : vector<8x16xf32>, vector<16x16xf32>, vector<8x16xf32> -> vector<8x16xf32>
    %13 = arith.addf %10, %12 : vector<8x16xf32>
    %c248 = arith.constant 248 : index
    %c0_11 = arith.constant 0 : index
    %14 = vector.load %arg3[%c248, %c0_11] : memref<280x16xf32, #tpu.memory_space<vmem>>, vector<1x16xf32>
    %15 = vector.broadcast %14 : vector<1x16xf32> to vector<8x16xf32>
    %16 = arith.addf %13, %15 : vector<8x16xf32>
    %cst_12 = arith.constant 0.000000e+00 : f32
    %17 = vector.broadcast %cst_12 : f32 to vector<8x16xf32>
    %18 = arith.maximumf %16, %17 : vector<8x16xf32>
    %c80 = arith.constant 80 : index
    %c0_13 = arith.constant 0 : index
    %19 = vector.load %arg3[%c80, %c0_13] : memref<280x16xf32, #tpu.memory_space<vmem>>, vector<32x16xf32>
    %cst_14 = arith.constant dense<0.000000e+00> : vector<8x16xf32>
    %20 = tpu.matmul %0, %19, %cst_14 {dimension_numbers = #tpu.dot_dimension_numbers<[1], [0], [0], [1], [0, 0, 1, 1], [], []>} : vector<8x32xf32>, vector<32x16xf32>, vector<8x16xf32> -> vector<8x16xf32>
    %c112 = arith.constant 112 : index
    %c0_15 = arith.constant 0 : index
    %21 = vector.load %arg3[%c112, %c0_15] : memref<280x16xf32, #tpu.memory_space<vmem>>, vector<16x16xf32>
    %cst_16 = arith.constant dense<0.000000e+00> : vector<8x16xf32>
    %22 = tpu.matmul %18, %21, %cst_16 {dimension_numbers = #tpu.dot_dimension_numbers<[1], [0], [0], [1], [0, 0, 1, 1], [], []>} : vector<8x16xf32>, vector<16x16xf32>, vector<8x16xf32> -> vector<8x16xf32>
    %23 = arith.addf %20, %22 : vector<8x16xf32>
    %c256 = arith.constant 256 : index
    %c0_17 = arith.constant 0 : index
    %24 = vector.load %arg3[%c256, %c0_17] : memref<280x16xf32, #tpu.memory_space<vmem>>, vector<1x16xf32>
    %25 = vector.broadcast %24 : vector<1x16xf32> to vector<8x16xf32>
    %26 = arith.addf %23, %25 : vector<8x16xf32>
    %cst_18 = arith.constant 0.000000e+00 : f32
    %27 = vector.broadcast %cst_18 : f32 to vector<8x16xf32>
    %28 = arith.maximumf %26, %27 : vector<8x16xf32>
    %c128 = arith.constant 128 : index
    %c0_19 = arith.constant 0 : index
    %29 = vector.load %arg3[%c128, %c0_19] : memref<280x16xf32, #tpu.memory_space<vmem>>, vector<32x16xf32>
    %cst_20 = arith.constant dense<0.000000e+00> : vector<8x16xf32>
    %30 = tpu.matmul %1, %29, %cst_20 {dimension_numbers = #tpu.dot_dimension_numbers<[1], [0], [0], [1], [0, 0, 1, 1], [], []>} : vector<8x32xf32>, vector<32x16xf32>, vector<8x16xf32> -> vector<8x16xf32>
    %c160 = arith.constant 160 : index
    %c0_21 = arith.constant 0 : index
    %31 = vector.load %arg3[%c160, %c0_21] : memref<280x16xf32, #tpu.memory_space<vmem>>, vector<16x16xf32>
    %cst_22 = arith.constant dense<0.000000e+00> : vector<8x16xf32>
    %32 = tpu.matmul %28, %31, %cst_22 {dimension_numbers = #tpu.dot_dimension_numbers<[1], [0], [0], [1], [0, 0, 1, 1], [], []>} : vector<8x16xf32>, vector<16x16xf32>, vector<8x16xf32> -> vector<8x16xf32>
    %33 = arith.addf %30, %32 : vector<8x16xf32>
    %c264 = arith.constant 264 : index
    %c0_23 = arith.constant 0 : index
    %34 = vector.load %arg3[%c264, %c0_23] : memref<280x16xf32, #tpu.memory_space<vmem>>, vector<1x16xf32>
    %35 = vector.broadcast %34 : vector<1x16xf32> to vector<8x16xf32>
    %36 = arith.addf %33, %35 : vector<8x16xf32>
    %cst_24 = arith.constant 0.000000e+00 : f32
    %37 = vector.broadcast %cst_24 : f32 to vector<8x16xf32>
    %38 = arith.maximumf %36, %37 : vector<8x16xf32>
    %c176 = arith.constant 176 : index
    %c0_25 = arith.constant 0 : index
    %39 = vector.load %arg3[%c176, %c0_25] : memref<280x16xf32, #tpu.memory_space<vmem>>, vector<16x10xf32>
    %cst_26 = arith.constant dense<0.000000e+00> : vector<8x10xf32>
    %40 = tpu.matmul %8, %39, %cst_26 {dimension_numbers = #tpu.dot_dimension_numbers<[1], [0], [0], [1], [0, 0, 1, 1], [], []>} : vector<8x16xf32>, vector<16x10xf32>, vector<8x10xf32> -> vector<8x10xf32>
    %c192 = arith.constant 192 : index
    %c0_27 = arith.constant 0 : index
    %41 = vector.load %arg3[%c192, %c0_27] : memref<280x16xf32, #tpu.memory_space<vmem>>, vector<16x10xf32>
    %cst_28 = arith.constant dense<0.000000e+00> : vector<8x10xf32>
    %42 = tpu.matmul %18, %41, %cst_28 {dimension_numbers = #tpu.dot_dimension_numbers<[1], [0], [0], [1], [0, 0, 1, 1], [], []>} : vector<8x16xf32>, vector<16x10xf32>, vector<8x10xf32> -> vector<8x10xf32>
    %43 = arith.addf %40, %42 : vector<8x10xf32>
    %c208 = arith.constant 208 : index
    %c0_29 = arith.constant 0 : index
    %44 = vector.load %arg3[%c208, %c0_29] : memref<280x16xf32, #tpu.memory_space<vmem>>, vector<16x10xf32>
    %cst_30 = arith.constant dense<0.000000e+00> : vector<8x10xf32>
    %45 = tpu.matmul %28, %44, %cst_30 {dimension_numbers = #tpu.dot_dimension_numbers<[1], [0], [0], [1], [0, 0, 1, 1], [], []>} : vector<8x16xf32>, vector<16x10xf32>, vector<8x10xf32> -> vector<8x10xf32>
    %46 = arith.addf %43, %45 : vector<8x10xf32>
    %c224 = arith.constant 224 : index
    %c0_31 = arith.constant 0 : index
    %47 = vector.load %arg3[%c224, %c0_31] : memref<280x16xf32, #tpu.memory_space<vmem>>, vector<16x10xf32>
    %cst_32 = arith.constant dense<0.000000e+00> : vector<8x10xf32>
    %48 = tpu.matmul %38, %47, %cst_32 {dimension_numbers = #tpu.dot_dimension_numbers<[1], [0], [0], [1], [0, 0, 1, 1], [], []>} : vector<8x16xf32>, vector<16x10xf32>, vector<8x10xf32> -> vector<8x10xf32>
    %49 = arith.addf %46, %48 : vector<8x10xf32>
    %c272 = arith.constant 272 : index
    %c0_33 = arith.constant 0 : index
    %50 = vector.load %arg3[%c272, %c0_33] : memref<280x16xf32, #tpu.memory_space<vmem>>, vector<1x10xf32>
    %51 = vector.broadcast %50 : vector<1x10xf32> to vector<8x10xf32>
    %52 = arith.addf %49, %51 : vector<8x10xf32>
    %c0_34 = arith.constant 0 : index
    %c0_35 = arith.constant 0 : index
    %53 = vector.load %arg4[%c0_34, %c0_35] : memref<8x10xf32, #tpu.memory_space<vmem>>, vector<8x10xf32>
    tpu.vector_store %arg4[%c0_34, %c0_35], %52 {strides = array<i32>} : memref<8x10xf32, #tpu.memory_space<vmem>>, vector<8x10xf32>,
    return
  }
  func.func @transform_0(%arg0: i32) -> (i32, i32) {
    %c0_i32 = arith.constant 0 : i32
    %c0_i32_0 = arith.constant 0 : i32
    return %arg0, %c0_i32 : i32, i32
  }
  func.func @transform_1(%arg0: i32) -> (i32, i32) {
    %c0_i32 = arith.constant 0 : i32
    %c0_i32_0 = arith.constant 0 : i32
    return %arg0, %c0_i32 : i32, i32
  }
  func.func @transform_2(%arg0: i32) -> (i32, i32) {
    %c0_i32 = arith.constant 0 : i32
    %c0_i32_0 = arith.constant 0 : i32
    %c0_i32_1 = arith.constant 0 : i32
    return %c0_i32, %c0_i32_0 : i32, i32
  }
  func.func @transform_3(%arg0: i32) -> (i32, i32) {
    %c0_i32 = arith.constant 0 : i32
    %c0_i32_0 = arith.constant 0 : i32
    return %arg0, %c0_i32 : i32, i32
  }
}

</mosaic_0001>

<llo_original>
// kernel: tpu_custom_call.1
$region0: #{tpu_custom_call.1}
  #allocation0 [shape = 'u32[]', space=smem, size = 0x4, offset = 0x4, fixed_abs, tag = 'smem constant byte address 0x4 - core index']
  #allocation1 [shape = 'u32[144,128]{1,0:T(1,128)}', space=vmem, size = 0x12000, scoped, tag = 'internal scratch']
  %s0 = inlined_call_operand.vmem [shape: f32[8,32], index: 0, kind: input, shape index: {}]
  %s1 = inlined_call_operand.vmem [shape: f32[8,32], index: 1, kind: input, shape index: {}]
  %s2 = inlined_call_operand.vmem [shape: f32[280,16], index: 2, kind: input, shape index: {}]
  %s3 = inlined_call_operand.hbm [shape: f32[8,10], index: 3, kind: output, shape index: {}]
  %s4 = sld [smem:[#allocation0]]
  $region22: #{tpu_custom_call.1} parent=0
    _
  %s6 = ssub.s32 1, %s4
  %s7 = scalar_select 0, %s6, %s4
  $region1: #{tpu_custom_call.1} parent=0
    #allocation2 [shape = 'u8[4096]{0}', space=vmem, size = 0x1000, scoped, tag = 'output window, operand 0, single buffered']
    #allocation3 [shape = 's32[1]{0}', space=sflag, size = 0x4, scoped, tag = 'scoped memory for tpu_custom_call.1']
    %8 = vsyncpa [#allocation3], 0
    // Predicated region
    $region2: #{tpu_custom_call.1} parent=1 // pred_check
      _
    $region3: #{tpu_custom_call.1} parent=1 // pred_check_branch
      %10 = sbr.rel (0) target = $region5
    $region4: #{tpu_custom_call.1} parent=1 // pred_region
      _
    $region5: #{tpu_custom_call.1} parent=1 // pred_fallthru
      _
    // Predicated region
    $region6: #{tpu_custom_call.1} parent=1 // pred_check
      _
    $region7: #{tpu_custom_call.1} parent=1 // pred_check_branch
      %12 = sbr.rel (0) target = $region9
    $region8: #{tpu_custom_call.1} parent=1 // pred_region
      _
    $region9: #{tpu_custom_call.1} parent=1 // pred_fallthru
      _
    // Predicated region
    $region10: #{tpu_custom_call.1} parent=1 // pred_check
      _
    $region11: #{tpu_custom_call.1} parent=1 // pred_check_branch
      %14 = sbr.rel (0) target = $region13
    $region12: #{tpu_custom_call.1} parent=1 // pred_region
      _
    $region13: #{tpu_custom_call.1} parent=1 // pred_fallthru
      _
    %v15 = vld [vmem:[%s0] sm:$0xff]
    %v16 = vld [vmem:[%s1] sm:$0xff]
    %v17 = vld [vmem:[%s2] sm:$0xff]
    %v18 = vld [vmem:[%s2 + $0x8] sm:$0xff]
    %v19 = vld [vmem:[%s2 + $0x10] sm:$0xff]
    %v20 = vld [vmem:[%s2 + $0x18] sm:$0xff]
    %v21 = vld [vmem:[%s2 + $0xf0] sm:$0x1]
    %v22 = vlaneseq
    %v23 = vshrl.u32 %v22, 7
    %v24 = vsub.s32 0, %v23
    %v25 = vrot.slane %v21, %v24
    %vm26 = vcmask 261120
    %v28 = vsel %vm26, %v15, 0
    %30 = vmatprep.subr.mxu0 0.0
    %31 = vmatpush1.msra.mxu0 %v17
    %32 = vmatprep.subr.mxu0 0.0
    %33 = vmatpush1.msra.mxu0 %v18
    %34 = vmatprep.subr.mxu0 0.0
    %35 = vmatpush1.msra.mxu0 %v19
    %36 = vmatprep.subr.mxu0 0.0
    %37 = vmatpush1.msra.mxu0 %v20
    %38 = vmatprep.subr.mxu0 0.0
    %39 = vmatpush1.msra.mxu0 0.0
    %40 = vmatprep.subr.mxu0 0.0
    %41 = vmatpush1.msra.mxu0 0.0
    %42 = vmatprep.subr.mxu0 0.0
    %43 = vmatpush1.msra.mxu0 0.0
    %44 = vmatprep.subr.mxu0 0.0
    %45 = vmatpush1.msra.mxu0 0.0
    %46 = vmatprep.subr.mxu0 0.0
    %47 = vmatpush1.msra.mxu0 0.0
    %48 = vmatprep.subr.mxu0 0.0
    %49 = vmatpush1.msra.mxu0 0.0
    %50 = vmatprep.subr.mxu0 0.0
    %51 = vmatpush1.msra.mxu0 0.0
    %52 = vmatprep.subr.mxu0 0.0
    %53 = vmatpush1.msra.mxu0 0.0
    %54 = vmatprep.subr.mxu0 0.0
    %55 = vmatpush1.msra.mxu0 0.0
    %56 = vmatprep.subr.mxu0 0.0
    %57 = vmatpush1.msra.mxu0 0.0
    %58 = vmatprep.subr.mxu0 0.0
    %59 = vmatpush1.msra.mxu0 0.0
    %60 = vmatprep.subr.mxu0 0.0
    %61 = vmatpush1.msra.mxu0 0.0
    %62 = vmatprep.subr.mxu0 0.0
    %63 = vmatpush1.msra.mxu0 0.0
    %64 = vmatprep.subr.mxu0 0.0
    %65 = vmatpush1.msra.mxu0 0.0
    %66 = vmatprep.subr.mxu0 0.0
    %67 = vmatpush1.msra.mxu0 0.0
    %68 = vmatprep.subr.mxu0 0.0
    %69 = vmatpush1.msra.mxu0 0.0
    %70 = vmatprep.subr.mxu0 0.0
    %71 = vmatpush1.msra.mxu0 0.0
    %72 = vmatprep.subr.mxu0 0.0
    %73 = vmatpush1.msra.mxu0 0.0
    %74 = vmatprep.subr.mxu0 0.0
    %75 = vmatpush1.msra.mxu0 0.0
    %76 = vmatprep.subr.mxu0 0.0
    %77 = vmatpush1.msra.mxu0 0.0
    %78 = vmatprep.subr.mxu0 0.0
    %79 = vmatpush1.msra.mxu0 0.0
    %80 = vmatprep.subr.mxu0 0.0
    %81 = vmatpush1.msra.mxu0 0.0
    %82 = vmatprep.subr.mxu0 0.0
    %83 = vmatpush1.msra.mxu0 0.0
    %84 = vmatprep.subr.mxu0 0.0
    %85 = vmatpush1.msra.mxu0 0.0
    %86 = vmatprep.subr.mxu0 0.0
    %87 = vmatpush1.msra.mxu0 0.0
    %88 = vmatprep.subr.mxu0 0.0
    %89 = vmatpush1.msra.mxu0 0.0
    %90 = vmatprep.subr.mxu0 0.0
    %91 = vmatpush1.msra.mxu0 0.0
    %92 = vmatprep.subr.mxu0 0.0
    %93 = vmatpush1.msra.mxu0 0.0
    %94 = vmatprep.mubr.f32.mxu0 0.0
    %95 = vmatmul.mubr.f32.gmra.mrb[0].mxu0 %v28
    %v96 = vpop.f32.mrb[0].mxu0
    %v97 = vadd.f32 %v25, %v96
    %v98 = vpop.f32.mrb[0].mxu0
    %99 = vdwg.mxu0
    %v100 = vmax.f32 %v97, 0.0
    %v101 = vld [vmem:[%s2 + $0x20] sm:$0xff]
    %v102 = vld [vmem:[%s2 + $0x28] sm:$0xff]
    %v103 = vld [vmem:[%s2 + $0x30] sm:$0xff]
    %v104 = vld [vmem:[%s2 + $0x38] sm:$0xff]
    %v105 = vld [vmem:[%s2 + $0x40] sm:$0xff]
    %v106 = vld [vmem:[%s2 + $0x48] sm:$0xff]
    %vm107 = vcmask 130048
    %v109 = vsel %vm107, %v100, 0
    %111 = vmatprep.subr.mxu0 0.0
    %112 = vmatpush1.msra.mxu0 %v105
    %113 = vmatprep.subr.mxu0 0.0
    %114 = vmatpush1.msra.mxu0 %v106
    %115 = vmatprep.subr.mxu0 0.0
    %116 = vmatpush1.msra.mxu0 0.0
    %117 = vmatprep.subr.mxu0 0.0
    %118 = vmatpush1.msra.mxu0 0.0
    %119 = vmatprep.subr.mxu0 0.0
    %120 = vmatpush1.msra.mxu0 0.0
    %121 = vmatprep.subr.mxu0 0.0
    %122 = vmatpush1.msra.mxu0 0.0
    %123 = vmatprep.subr.mxu0 0.0
    %124 = vmatpush1.msra.mxu0 0.0
    %125 = vmatprep.subr.mxu0 0.0
    %126 = vmatpush1.msra.mxu0 0.0
    %127 = vmatprep.subr.mxu0 0.0
    %128 = vmatpush1.msra.mxu0 0.0
    %129 = vmatprep.subr.mxu0 0.0
    %130 = vmatpush1.msra.mxu0 0.0
    %131 = vmatprep.subr.mxu0 0.0
    %132 = vmatpush1.msra.mxu0 0.0
    %133 = vmatprep.subr.mxu0 0.0
    %134 = vmatpush1.msra.mxu0 0.0
    %135 = vmatprep.subr.mxu0 0.0
    %136 = vmatpush1.msra.mxu0 0.0
    %137 = vmatprep.subr.mxu0 0.0
    %138 = vmatpush1.msra.mxu0 0.0
    %139 = vmatprep.subr.mxu0 0.0
    %140 = vmatpush1.msra.mxu0 0.0
    %141 = vmatprep.subr.mxu0 0.0
    %142 = vmatpush1.msra.mxu0 0.0
    %143 = vmatprep.subr.mxu0 0.0
    %144 = vmatpush1.msra.mxu0 0.0
    %145 = vmatprep.subr.mxu0 0.0
    %146 = vmatpush1.msra.mxu0 0.0
    %147 = vmatprep.subr.mxu0 0.0
    %148 = vmatpush1.msra.mxu0 0.0
    %149 = vmatprep.subr.mxu0 0.0
    %150 = vmatpush1.msra.mxu0 0.0
    %151 = vmatprep.subr.mxu0 0.0
    %152 = vmatpush1.msra.mxu0 0.0
    %153 = vmatprep.subr.mxu0 0.0
    %154 = vmatpush1.msra.mxu0 0.0
    %155 = vmatprep.subr.mxu0 0.0
    %156 = vmatpush1.msra.mxu0 0.0
    %157 = vmatprep.subr.mxu0 0.0
    %158 = vmatpush1.msra.mxu0 0.0
    %159 = vmatprep.subr.mxu0 0.0
    %160 = vmatpush1.msra.mxu0 0.0
    %161 = vmatprep.subr.mxu0 0.0
    %162 = vmatpush1.msra.mxu0 0.0
    %163 = vmatprep.subr.mxu0 0.0
    %164 = vmatpush1.msra.mxu0 0.0
    %165 = vmatprep.subr.mxu0 0.0
    %166 = vmatpush1.msra.mxu0 0.0
    %167 = vmatprep.subr.mxu0 0.0
    %168 = vmatpush1.msra.mxu0 0.0
    %169 = vmatprep.subr.mxu0 0.0
    %170 = vmatpush1.msra.mxu0 0.0
    %171 = vmatprep.subr.mxu0 0.0
    %172 = vmatpush1.msra.mxu0 0.0
    %173 = vmatprep.subr.mxu0 0.0
    %174 = vmatpush1.msra.mxu0 0.0
    %175 = vmatprep.mubr.f32.mxu0 0.0
    %176 = vmatmul.mubr.f32.gmra.mrb[0].mxu0 %v109
    %v177 = vpop.f32.mrb[0].mxu0
    %v178 = vadd.f32 0.0, %v177
    %v179 = vpop.f32.mrb[0].mxu0
    %180 = vdwg.mxu0
    %v182 = vsel %vm26, %v16, 0
    %184 = vmatprep.subr.mxu0 0.0
    %185 = vmatpush1.msra.mxu0 %v101
    %186 = vmatprep.subr.mxu0 0.0
    %187 = vmatpush1.msra.mxu0 %v102
    %188 = vmatprep.subr.mxu0 0.0
    %189 = vmatpush1.msra.mxu0 %v103
    %190 = vmatprep.subr.mxu0 0.0
    %191 = vmatpush1.msra.mxu0 %v104
    %192 = vmatprep.subr.mxu0 0.0
    %193 = vmatpush1.msra.mxu0 0.0
    %194 = vmatprep.subr.mxu0 0.0
    %195 = vmatpush1.msra.mxu0 0.0
    %196 = vmatprep.subr.mxu0 0.0
    %197 = vmatpush1.msra.mxu0 0.0
    %198 = vmatprep.subr.mxu0 0.0
    %199 = vmatpush1.msra.mxu0 0.0
    %200 = vmatprep.subr.mxu0 0.0
    %201 = vmatpush1.msra.mxu0 0.0
    %202 = vmatprep.subr.mxu0 0.0
    %203 = vmatpush1.msra.mxu0 0.0
    %204 = vmatprep.subr.mxu0 0.0
    %205 = vmatpush1.msra.mxu0 0.0
    %206 = vmatprep.subr.mxu0 0.0
    %207 = vmatpush1.msra.mxu0 0.0
    %208 = vmatprep.subr.mxu0 0.0
    %209 = vmatpush1.msra.mxu0 0.0
    %210 = vmatprep.subr.mxu0 0.0
    %211 = vmatpush1.msra.mxu0 0.0
    %212 = vmatprep.subr.mxu0 0.0
    %213 = vmatpush1.msra.mxu0 0.0
    %214 = vmatprep.subr.mxu0 0.0
    %215 = vmatpush1.msra.mxu0 0.0
    %216 = vmatprep.subr.mxu0 0.0
    %217 = vmatpush1.msra.mxu0 0.0
    %218 = vmatprep.subr.mxu0 0.0
    %219 = vmatpush1.msra.mxu0 0.0
    %220 = vmatprep.subr.mxu0 0.0
    %221 = vmatpush1.msra.mxu0 0.0
    %222 = vmatprep.subr.mxu0 0.0
    %223 = vmatpush1.msra.mxu0 0.0
    %224 = vmatprep.subr.mxu0 0.0
    %225 = vmatpush1.msra.mxu0 0.0
    %226 = vmatprep.subr.mxu0 0.0
    %227 = vmatpush1.msra.mxu0 0.0
    %228 = vmatprep.subr.mxu0 0.0
    %229 = vmatpush1.msra.mxu0 0.0
    %230 = vmatprep.subr.mxu0 0.0
    %231 = vmatpush1.msra.mxu0 0.0
    %232 = vmatprep.subr.mxu0 0.0
    %233 = vmatpush1.msra.mxu0 0.0
    %234 = vmatprep.subr.mxu0 0.0
    %235 = vmatpush1.msra.mxu0 0.0
    %236 = vmatprep.subr.mxu0 0.0
    %237 = vmatpush1.msra.mxu0 0.0
    %238 = vmatprep.subr.mxu0 0.0
    %239 = vmatpush1.msra.mxu0 0.0
    %240 = vmatprep.subr.mxu0 0.0
    %241 = vmatpush1.msra.mxu0 0.0
    %242 = vmatprep.subr.mxu0 0.0
    %243 = vmatpush1.msra.mxu0 0.0
    %244 = vmatprep.subr.mxu0 0.0
    %245 = vmatpush1.msra.mxu0 0.0
    %246 = vmatprep.subr.mxu0 0.0
    %247 = vmatpush1.msra.mxu0 0.0
    %248 = vmatprep.mubr.f32.mxu0 0.0
    %249 = vmatmul.mubr.f32.gmra.mrb[0].mxu0 %v182
    %v250 = vpop.f32.mrb[0].mxu0
    %v251 = vadd.f32 %v178, %v250
    %v252 = vpop.f32.mrb[0].mxu0
    %253 = vdwg.mxu0
    %v254 = vld [vmem:[%s2 + $0xf8] sm:$0x1]
    %v255 = vlaneseq
    %v256 = vshrl.u32 %v255, 7
    %v257 = vsub.s32 0, %v256
    %v258 = vrot.slane %v254, %v257
    %v259 = vadd.f32 %v251, %v258
    %v260 = vmax.f32 %v259, 0.0
    %v261 = vld [vmem:[%s2 + $0x50] sm:$0xff]
    %v262 = vld [vmem:[%s2 + $0x58] sm:$0xff]
    %v263 = vld [vmem:[%s2 + $0x60] sm:$0xff]
    %v264 = vld [vmem:[%s2 + $0x68] sm:$0xff]
    %v265 = vld [vmem:[%s2 + $0x70] sm:$0xff]
    %v266 = vld [vmem:[%s2 + $0x78] sm:$0xff]
    %v268 = vsel %vm107, %v260, 0
    %270 = vmatprep.subr.mxu0 0.0
    %271 = vmatpush1.msra.mxu0 %v265
    %272 = vmatprep.subr.mxu0 0.0
    %273 = vmatpush1.msra.mxu0 %v266
    %274 = vmatprep.subr.mxu0 0.0
    %275 = vmatpush1.msra.mxu0 0.0
    %276 = vmatprep.subr.mxu0 0.0
    %277 = vmatpush1.msra.mxu0 0.0
    %278 = vmatprep.subr.mxu0 0.0
    %279 = vmatpush1.msra.mxu0 0.0
    %280 = vmatprep.subr.mxu0 0.0
    %281 = vmatpush1.msra.mxu0 0.0
    %282 = vmatprep.subr.mxu0 0.0
    %283 = vmatpush1.msra.mxu0 0.0
    %284 = vmatprep.subr.mxu0 0.0
    %285 = vmatpush1.msra.mxu0 0.0
    %286 = vmatprep.subr.mxu0 0.0
    %287 = vmatpush1.msra.mxu0 0.0
    %288 = vmatprep.subr.mxu0 0.0
    %289 = vmatpush1.msra.mxu0 0.0
    %290 = vmatprep.subr.mxu0 0.0
    %291 = vmatpush1.msra.mxu0 0.0
    %292 = vmatprep.subr.mxu0 0.0
    %293 = vmatpush1.msra.mxu0 0.0
    %294 = vmatprep.subr.mxu0 0.0
    %295 = vmatpush1.msra.mxu0 0.0
    %296 = vmatprep.subr.mxu0 0.0
    %297 = vmatpush1.msra.mxu0 0.0
    %298 = vmatprep.subr.mxu0 0.0
    %299 = vmatpush1.msra.mxu0 0.0
    %300 = vmatprep.subr.mxu0 0.0
    %301 = vmatpush1.msra.mxu0 0.0
    %302 = vmatprep.subr.mxu0 0.0
    %303 = vmatpush1.msra.mxu0 0.0
    %304 = vmatprep.subr.mxu0 0.0
    %305 = vmatpush1.msra.mxu0 0.0
    %306 = vmatprep.subr.mxu0 0.0
    %307 = vmatpush1.msra.mxu0 0.0
    %308 = vmatprep.subr.mxu0 0.0
    %309 = vmatpush1.msra.mxu0 0.0
    %310 = vmatprep.subr.mxu0 0.0
    %311 = vmatpush1.msra.mxu0 0.0
    %312 = vmatprep.subr.mxu0 0.0
    %313 = vmatpush1.msra.mxu0 0.0
    %314 = vmatprep.subr.mxu0 0.0
    %315 = vmatpush1.msra.mxu0 0.0
    %316 = vmatprep.subr.mxu0 0.0
    %317 = vmatpush1.msra.mxu0 0.0
    %318 = vmatprep.subr.mxu0 0.0
    %319 = vmatpush1.msra.mxu0 0.0
    %320 = vmatprep.subr.mxu0 0.0
    %321 = vmatpush1.msra.mxu0 0.0
    %322 = vmatprep.subr.mxu0 0.0
    %323 = vmatpush1.msra.mxu0 0.0
    %324 = vmatprep.subr.mxu0 0.0
    %325 = vmatpush1.msra.mxu0 0.0
    %326 = vmatprep.subr.mxu0 0.0
    %327 = vmatpush1.msra.mxu0 0.0
    %328 = vmatprep.subr.mxu0 0.0
    %329 = vmatpush1.msra.mxu0 0.0
    %330 = vmatprep.subr.mxu0 0.0
    %331 = vmatpush1.msra.mxu0 0.0
    %332 = vmatprep.subr.mxu0 0.0
    %333 = vmatpush1.msra.mxu0 0.0
    %334 = vmatprep.mubr.f32.mxu0 0.0
    %335 = vmatmul.mubr.f32.gmra.mrb[0].mxu0 %v268
    %v336 = vpop.f32.mrb[0].mxu0
    %v337 = vadd.f32 0.0, %v336
    %v338 = vpop.f32.mrb[0].mxu0
    %339 = vdwg.mxu0
    %340 = vmatprep.subr.mxu0 0.0
    %341 = vmatpush1.msra.mxu0 %v261
    %342 = vmatprep.subr.mxu0 0.0
    %343 = vmatpush1.msra.mxu0 %v262
    %344 = vmatprep.subr.mxu0 0.0
    %345 = vmatpush1.msra.mxu0 %v263
    %346 = vmatprep.subr.mxu0 0.0
    %347 = vmatpush1.msra.mxu0 %v264
    %348 = vmatprep.subr.mxu0 0.0
    %349 = vmatpush1.msra.mxu0 0.0
    %350 = vmatprep.subr.mxu0 0.0
    %351 = vmatpush1.msra.mxu0 0.0
    %352 = vmatprep.subr.mxu0 0.0
    %353 = vmatpush1.msra.mxu0 0.0
    %354 = vmatprep.subr.mxu0 0.0
    %355 = vmatpush1.msra.mxu0 0.0
    %356 = vmatprep.subr.mxu0 0.0
    %357 = vmatpush1.msra.mxu0 0.0
    %358 = vmatprep.subr.mxu0 0.0
    %359 = vmatpush1.msra.mxu0 0.0
    %360 = vmatprep.subr.mxu0 0.0
    %361 = vmatpush1.msra.mxu0 0.0
    %362 = vmatprep.subr.mxu0 0.0
    %363 = vmatpush1.msra.mxu0 0.0
    %364 = vmatprep.subr.mxu0 0.0
    %365 = vmatpush1.msra.mxu0 0.0
    %366 = vmatprep.subr.mxu0 0.0
    %367 = vmatpush1.msra.mxu0 0.0
    %368 = vmatprep.subr.mxu0 0.0
    %369 = vmatpush1.msra.mxu0 0.0
    %370 = vmatprep.subr.mxu0 0.0
    %371 = vmatpush1.msra.mxu0 0.0
    %372 = vmatprep.subr.mxu0 0.0
    %373 = vmatpush1.msra.mxu0 0.0
    %374 = vmatprep.subr.mxu0 0.0
    %375 = vmatpush1.msra.mxu0 0.0
    %376 = vmatprep.subr.mxu0 0.0
    %377 = vmatpush1.msra.mxu0 0.0
    %378 = vmatprep.subr.mxu0 0.0
    %379 = vmatpush1.msra.mxu0 0.0
    %380 = vmatprep.subr.mxu0 0.0
    %381 = vmatpush1.msra.mxu0 0.0
    %382 = vmatprep.subr.mxu0 0.0
    %383 = vmatpush1.msra.mxu0 0.0
    %384 = vmatprep.subr.mxu0 0.0
    %385 = vmatpush1.msra.mxu0 0.0
    %386 = vmatprep.subr.mxu0 0.0
    %387 = vmatpush1.msra.mxu0 0.0
    %388 = vmatprep.subr.mxu0 0.0
    %389 = vmatpush1.msra.mxu0 0.0
    %390 = vmatprep.subr.mxu0 0.0
    %391 = vmatpush1.msra.mxu0 0.0
    %392 = vmatprep.subr.mxu0 0.0
    %393 = vmatpush1.msra.mxu0 0.0
    %394 = vmatprep.subr.mxu0 0.0
    %395 = vmatpush1.msra.mxu0 0.0
    %396 = vmatprep.subr.mxu0 0.0
    %397 = vmatpush1.msra.mxu0 0.0
    %398 = vmatprep.subr.mxu0 0.0
    %399 = vmatpush1.msra.mxu0 0.0
    %400 = vmatprep.subr.mxu0 0.0
    %401 = vmatpush1.msra.mxu0 0.0
    %402 = vmatprep.subr.mxu0 0.0
    %403 = vmatpush1.msra.mxu0 0.0
    %404 = vmatprep.mubr.f32.mxu0 0.0
    %405 = vmatmul.mubr.f32.gmra.mrb[0].mxu0 %v28
    %v406 = vpop.f32.mrb[0].mxu0
    %v407 = vadd.f32 %v337, %v406
    %v408 = vpop.f32.mrb[0].mxu0
    %409 = vdwg.mxu0
    %v410 = vld [vmem:[%s2 + $0x100] sm:$0x1]
    %v411 = vlaneseq
    %v412 = vshrl.u32 %v411, 7
    %v413 = vsub.s32 0, %v412
    %v414 = vrot.slane %v410, %v413
    %v415 = vadd.f32 %v407, %v414
    %v416 = vmax.f32 %v415, 0.0
    %v417 = vld [vmem:[%s2 + $0x80] sm:$0xff]
    %v418 = vld [vmem:[%s2 + $0x88] sm:$0xff]
    %v419 = vld [vmem:[%s2 + $0x90] sm:$0xff]
    %v420 = vld [vmem:[%s2 + $0x98] sm:$0xff]
    %v421 = vld [vmem:[%s2 + $0xa0] sm:$0xff]
    %v422 = vld [vmem:[%s2 + $0xa8] sm:$0xff]
    %v424 = vsel %vm107, %v416, 0
    %426 = vmatprep.subr.mxu0 0.0
    %427 = vmatpush1.msra.mxu0 %v421
    %428 = vmatprep.subr.mxu0 0.0
    %429 = vmatpush1.msra.mxu0 %v422
    %430 = vmatprep.subr.mxu0 0.0
    %431 = vmatpush1.msra.mxu0 0.0
    %432 = vmatprep.subr.mxu0 0.0
    %433 = vmatpush1.msra.mxu0 0.0
    %434 = vmatprep.subr.mxu0 0.0
    %435 = vmatpush1.msra.mxu0 0.0
    %436 = vmatprep.subr.mxu0 0.0
    %437 = vmatpush1.msra.mxu0 0.0
    %438 = vmatprep.subr.mxu0 0.0
    %439 = vmatpush1.msra.mxu0 0.0
    %440 = vmatprep.subr.mxu0 0.0
    %441 = vmatpush1.msra.mxu0 0.0
    %442 = vmatprep.subr.mxu0 0.0
    %443 = vmatpush1.msra.mxu0 0.0
    %444 = vmatprep.subr.mxu0 0.0
    %445 = vmatpush1.msra.mxu0 0.0
    %446 = vmatprep.subr.mxu0 0.0
    %447 = vmatpush1.msra.mxu0 0.0
    %448 = vmatprep.subr.mxu0 0.0
    %449 = vmatpush1.msra.mxu0 0.0
    %450 = vmatprep.subr.mxu0 0.0
    %451 = vmatpush1.msra.mxu0 0.0
    %452 = vmatprep.subr.mxu0 0.0
    %453 = vmatpush1.msra.mxu0 0.0
    %454 = vmatprep.subr.mxu0 0.0
    %455 = vmatpush1.msra.mxu0 0.0
    %456 = vmatprep.subr.mxu0 0.0
    %457 = vmatpush1.msra.mxu0 0.0
    %458 = vmatprep.subr.mxu0 0.0
    %459 = vmatpush1.msra.mxu0 0.0
    %460 = vmatprep.subr.mxu0 0.0
    %461 = vmatpush1.msra.mxu0 0.0
    %462 = vmatprep.subr.mxu0 0.0
    %463 = vmatpush1.msra.mxu0 0.0
    %464 = vmatprep.subr.mxu0 0.0
    %465 = vmatpush1.msra.mxu0 0.0
    %466 = vmatprep.subr.mxu0 0.0
    %467 = vmatpush1.msra.mxu0 0.0
    %468 = vmatprep.subr.mxu0 0.0
    %469 = vmatpush1.msra.mxu0 0.0
    %470 = vmatprep.subr.mxu0 0.0
    %471 = vmatpush1.msra.mxu0 0.0
    %472 = vmatprep.subr.mxu0 0.0
    %473 = vmatpush1.msra.mxu0 0.0
    %474 = vmatprep.subr.mxu0 0.0
    %475 = vmatpush1.msra.mxu0 0.0
    %476 = vmatprep.subr.mxu0 0.0
    %477 = vmatpush1.msra.mxu0 0.0
    %478 = vmatprep.subr.mxu0 0.0
    %479 = vmatpush1.msra.mxu0 0.0
    %480 = vmatprep.subr.mxu0 0.0
    %481 = vmatpush1.msra.mxu0 0.0
    %482 = vmatprep.subr.mxu0 0.0
    %483 = vmatpush1.msra.mxu0 0.0
    %484 = vmatprep.subr.mxu0 0.0
    %485 = vmatpush1.msra.mxu0 0.0
    %486 = vmatprep.subr.mxu0 0.0
    %487 = vmatpush1.msra.mxu0 0.0
    %488 = vmatprep.subr.mxu0 0.0
    %489 = vmatpush1.msra.mxu0 0.0
    %490 = vmatprep.mubr.f32.mxu0 0.0
    %491 = vmatmul.mubr.f32.gmra.mrb[0].mxu0 %v424
    %v492 = vpop.f32.mrb[0].mxu0
    %v493 = vadd.f32 0.0, %v492
    %v494 = vpop.f32.mrb[0].mxu0
    %495 = vdwg.mxu0
    %496 = vmatprep.subr.mxu0 0.0
    %497 = vmatpush1.msra.mxu0 %v417
    %498 = vmatprep.subr.mxu0 0.0
    %499 = vmatpush1.msra.mxu0 %v418
    %500 = vmatprep.subr.mxu0 0.0
    %501 = vmatpush1.msra.mxu0 %v419
    %502 = vmatprep.subr.mxu0 0.0
    %503 = vmatpush1.msra.mxu0 %v420
    %504 = vmatprep.subr.mxu0 0.0
    %505 = vmatpush1.msra.mxu0 0.0
    %506 = vmatprep.subr.mxu0 0.0
    %507 = vmatpush1.msra.mxu0 0.0
    %508 = vmatprep.subr.mxu0 0.0
    %509 = vmatpush1.msra.mxu0 0.0
    %510 = vmatprep.subr.mxu0 0.0
    %511 = vmatpush1.msra.mxu0 0.0
    %512 = vmatprep.subr.mxu0 0.0
    %513 = vmatpush1.msra.mxu0 0.0
    %514 = vmatprep.subr.mxu0 0.0
    %515 = vmatpush1.msra.mxu0 0.0
    %516 = vmatprep.subr.mxu0 0.0
    %517 = vmatpush1.msra.mxu0 0.0
    %518 = vmatprep.subr.mxu0 0.0
    %519 = vmatpush1.msra.mxu0 0.0
    %520 = vmatprep.subr.mxu0 0.0
    %521 = vmatpush1.msra.mxu0 0.0
    %522 = vmatprep.subr.mxu0 0.0
    %523 = vmatpush1.msra.mxu0 0.0
    %524 = vmatprep.subr.mxu0 0.0
    %525 = vmatpush1.msra.mxu0 0.0
    %526 = vmatprep.subr.mxu0 0.0
    %527 = vmatpush1.msra.mxu0 0.0
    %528 = vmatprep.subr.mxu0 0.0
    %529 = vmatpush1.msra.mxu0 0.0
    %530 = vmatprep.subr.mxu0 0.0
    %531 = vmatpush1.msra.mxu0 0.0
    %532 = vmatprep.subr.mxu0 0.0
    %533 = vmatpush1.msra.mxu0 0.0
    %534 = vmatprep.subr.mxu0 0.0
    %535 = vmatpush1.msra.mxu0 0.0
    %536 = vmatprep.subr.mxu0 0.0
    %537 = vmatpush1.msra.mxu0 0.0
    %538 = vmatprep.subr.mxu0 0.0
    %539 = vmatpush1.msra.mxu0 0.0
    %540 = vmatprep.subr.mxu0 0.0
    %541 = vmatpush1.msra.mxu0 0.0
    %542 = vmatprep.subr.mxu0 0.0
    %543 = vmatpush1.msra.mxu0 0.0
    %544 = vmatprep.subr.mxu0 0.0
    %545 = vmatpush1.msra.mxu0 0.0
    %546 = vmatprep.subr.mxu0 0.0
    %547 = vmatpush1.msra.mxu0 0.0
    %548 = vmatprep.subr.mxu0 0.0
    %549 = vmatpush1.msra.mxu0 0.0
    %550 = vmatprep.subr.mxu0 0.0
    %551 = vmatpush1.msra.mxu0 0.0
    %552 = vmatprep.subr.mxu0 0.0
    %553 = vmatpush1.msra.mxu0 0.0
    %554 = vmatprep.subr.mxu0 0.0
    %555 = vmatpush1.msra.mxu0 0.0
    %556 = vmatprep.subr.mxu0 0.0
    %557 = vmatpush1.msra.mxu0 0.0
    %558 = vmatprep.subr.mxu0 0.0
    %559 = vmatpush1.msra.mxu0 0.0
    %560 = vmatprep.mubr.f32.mxu0 0.0
    %561 = vmatmul.mubr.f32.gmra.mrb[0].mxu0 %v182
    %v562 = vpop.f32.mrb[0].mxu0
    %v563 = vadd.f32 %v493, %v562
    %v564 = vpop.f32.mrb[0].mxu0
    %565 = vdwg.mxu0
    %v566 = vld [vmem:[%s2 + $0x108] sm:$0x1]
    %v567 = vlaneseq
    %v568 = vshrl.u32 %v567, 7
    %v569 = vsub.s32 0, %v568
    %v570 = vrot.slane %v566, %v569
    %v571 = vadd.f32 %v563, %v570
    %v572 = vmax.f32 %v571, 0.0
    %v573 = vld [vmem:[%s2 + $0xb0] sm:$0xff]
    %v574 = vld [vmem:[%s2 + $0xb8] sm:$0xff]
    %v575 = vld [vmem:[%s2 + $0xc0] sm:$0xff]
    %v576 = vld [vmem:[%s2 + $0xc8] sm:$0xff]
    %577 = vmatprep.subr.mxu0 0.0
    %578 = vmatpush1.msra.mxu0 %v575
    %579 = vmatprep.subr.mxu0 0.0
    %580 = vmatpush1.msra.mxu0 %v576
    %581 = vmatprep.subr.mxu0 0.0
    %582 = vmatpush1.msra.mxu0 0.0
    %583 = vmatprep.subr.mxu0 0.0
    %584 = vmatpush1.msra.mxu0 0.0
    %585 = vmatprep.subr.mxu0 0.0
    %586 = vmatpush1.msra.mxu0 0.0
    %587 = vmatprep.subr.mxu0 0.0
    %588 = vmatpush1.msra.mxu0 0.0
    %589 = vmatprep.subr.mxu0 0.0
    %590 = vmatpush1.msra.mxu0 0.0
    %591 = vmatprep.subr.mxu0 0.0
    %592 = vmatpush1.msra.mxu0 0.0
    %593 = vmatprep.subr.mxu0 0.0
    %594 = vmatpush1.msra.mxu0 0.0
    %595 = vmatprep.subr.mxu0 0.0
    %596 = vmatpush1.msra.mxu0 0.0
    %597 = vmatprep.subr.mxu0 0.0
    %598 = vmatpush1.msra.mxu0 0.0
    %599 = vmatprep.subr.mxu0 0.0
    %600 = vmatpush1.msra.mxu0 0.0
    %601 = vmatprep.subr.mxu0 0.0
    %602 = vmatpush1.msra.mxu0 0.0
    %603 = vmatprep.subr.mxu0 0.0
    %604 = vmatpush1.msra.mxu0 0.0
    %605 = vmatprep.subr.mxu0 0.0
    %606 = vmatpush1.msra.mxu0 0.0
    %607 = vmatprep.subr.mxu0 0.0
    %608 = vmatpush1.msra.mxu0 0.0
    %609 = vmatprep.subr.mxu0 0.0
    %610 = vmatpush1.msra.mxu0 0.0
    %611 = vmatprep.subr.mxu0 0.0
    %612 = vmatpush1.msra.mxu0 0.0
    %613 = vmatprep.subr.mxu0 0.0
    %614 = vmatpush1.msra.mxu0 0.0
    %615 = vmatprep.subr.mxu0 0.0
    %616 = vmatpush1.msra.mxu0 0.0
    %617 = vmatprep.subr.mxu0 0.0
    %618 = vmatpush1.msra.mxu0 0.0
    %619 = vmatprep.subr.mxu0 0.0
    %620 = vmatpush1.msra.mxu0 0.0
    %621 = vmatprep.subr.mxu0 0.0
    %622 = vmatpush1.msra.mxu0 0.0
    %623 = vmatprep.subr.mxu0 0.0
    %624 = vmatpush1.msra.mxu0 0.0
    %625 = vmatprep.subr.mxu0 0.0
    %626 = vmatpush1.msra.mxu0 0.0
    %627 = vmatprep.subr.mxu0 0.0
    %628 = vmatpush1.msra.mxu0 0.0
    %629 = vmatprep.subr.mxu0 0.0
    %630 = vmatpush1.msra.mxu0 0.0
    %631 = vmatprep.subr.mxu0 0.0
    %632 = vmatpush1.msra.mxu0 0.0
    %633 = vmatprep.subr.mxu0 0.0
    %634 = vmatpush1.msra.mxu0 0.0
    %635 = vmatprep.subr.mxu0 0.0
    %636 = vmatpush1.msra.mxu0 0.0
    %637 = vmatprep.subr.mxu0 0.0
    %638 = vmatpush1.msra.mxu0 0.0
    %639 = vmatprep.subr.mxu0 0.0
    %640 = vmatpush1.msra.mxu0 0.0
    %641 = vmatprep.mubr.f32.mxu0 0.0
    %642 = vmatmul.mubr.f32.gmra.mrb[0].mxu0 %v268
    %v643 = vpop.f32.mrb[0].mxu0
    %v644 = vadd.f32 0.0, %v643
    %v645 = vpop.f32.mrb[0].mxu0
    %646 = vdwg.mxu0
    %647 = vmatprep.subr.mxu0 0.0
    %648 = vmatpush1.msra.mxu0 %v573
    %649 = vmatprep.subr.mxu0 0.0
    %650 = vmatpush1.msra.mxu0 %v574
    %651 = vmatprep.subr.mxu0 0.0
    %652 = vmatpush1.msra.mxu0 0.0
    %653 = vmatprep.subr.mxu0 0.0
    %654 = vmatpush1.msra.mxu0 0.0
    %655 = vmatprep.subr.mxu0 0.0
    %656 = vmatpush1.msra.mxu0 0.0
    %657 = vmatprep.subr.mxu0 0.0
    %658 = vmatpush1.msra.mxu0 0.0
    %659 = vmatprep.subr.mxu0 0.0
    %660 = vmatpush1.msra.mxu0 0.0
    %661 = vmatprep.subr.mxu0 0.0
    %662 = vmatpush1.msra.mxu0 0.0
    %663 = vmatprep.subr.mxu0 0.0
    %664 = vmatpush1.msra.mxu0 0.0
    %665 = vmatprep.subr.mxu0 0.0
    %666 = vmatpush1.msra.mxu0 0.0
    %667 = vmatprep.subr.mxu0 0.0
    %668 = vmatpush1.msra.mxu0 0.0
    %669 = vmatprep.subr.mxu0 0.0
    %670 = vmatpush1.msra.mxu0 0.0
    %671 = vmatprep.subr.mxu0 0.0
    %672 = vmatpush1.msra.mxu0 0.0
    %673 = vmatprep.subr.mxu0 0.0
    %674 = vmatpush1.msra.mxu0 0.0
    %675 = vmatprep.subr.mxu0 0.0
    %676 = vmatpush1.msra.mxu0 0.0
    %677 = vmatprep.subr.mxu0 0.0
    %678 = vmatpush1.msra.mxu0 0.0
    %679 = vmatprep.subr.mxu0 0.0
    %680 = vmatpush1.msra.mxu0 0.0
    %681 = vmatprep.subr.mxu0 0.0
    %682 = vmatpush1.msra.mxu0 0.0
    %683 = vmatprep.subr.mxu0 0.0
    %684 = vmatpush1.msra.mxu0 0.0
    %685 = vmatprep.subr.mxu0 0.0
    %686 = vmatpush1.msra.mxu0 0.0
    %687 = vmatprep.subr.mxu0 0.0
    %688 = vmatpush1.msra.mxu0 0.0
    %689 = vmatprep.subr.mxu0 0.0
    %690 = vmatpush1.msra.mxu0 0.0
    %691 = vmatprep.subr.mxu0 0.0
    %692 = vmatpush1.msra.mxu0 0.0
    %693 = vmatprep.subr.mxu0 0.0
    %694 = vmatpush1.msra.mxu0 0.0
    %695 = vmatprep.subr.mxu0 0.0
    %696 = vmatpush1.msra.mxu0 0.0
    %697 = vmatprep.subr.mxu0 0.0
    %698 = vmatpush1.msra.mxu0 0.0
    %699 = vmatprep.subr.mxu0 0.0
    %700 = vmatpush1.msra.mxu0 0.0
    %701 = vmatprep.subr.mxu0 0.0
    %702 = vmatpush1.msra.mxu0 0.0
    %703 = vmatprep.subr.mxu0 0.0
    %704 = vmatpush1.msra.mxu0 0.0
    %705 = vmatprep.subr.mxu0 0.0
    %706 = vmatpush1.msra.mxu0 0.0
    %707 = vmatprep.subr.mxu0 0.0
    %708 = vmatpush1.msra.mxu0 0.0
    %709 = vmatprep.subr.mxu0 0.0
    %710 = vmatpush1.msra.mxu0 0.0
    %711 = vmatprep.mubr.f32.mxu0 0.0
    %712 = vmatmul.mubr.f32.gmra.mrb[0].mxu0 %v109
    %v713 = vpop.f32.mrb[0].mxu0
    %v714 = vadd.f32 %v644, %v713
    %v715 = vpop.f32.mrb[0].mxu0
    %716 = vdwg.mxu0
    %v717 = vld [vmem:[%s2 + $0xd0] sm:$0xff]
    %v718 = vld [vmem:[%s2 + $0xd8] sm:$0xff]
    %719 = vmatprep.subr.mxu0 0.0
    %720 = vmatpush1.msra.mxu0 %v717
    %721 = vmatprep.subr.mxu0 0.0
    %722 = vmatpush1.msra.mxu0 %v718
    %723 = vmatprep.subr.mxu0 0.0
    %724 = vmatpush1.msra.mxu0 0.0
    %725 = vmatprep.subr.mxu0 0.0
    %726 = vmatpush1.msra.mxu0 0.0
    %727 = vmatprep.subr.mxu0 0.0
    %728 = vmatpush1.msra.mxu0 0.0
    %729 = vmatprep.subr.mxu0 0.0
    %730 = vmatpush1.msra.mxu0 0.0
    %731 = vmatprep.subr.mxu0 0.0
    %732 = vmatpush1.msra.mxu0 0.0
    %733 = vmatprep.subr.mxu0 0.0
    %734 = vmatpush1.msra.mxu0 0.0
    %735 = vmatprep.subr.mxu0 0.0
    %736 = vmatpush1.msra.mxu0 0.0
    %737 = vmatprep.subr.mxu0 0.0
    %738 = vmatpush1.msra.mxu0 0.0
    %739 = vmatprep.subr.mxu0 0.0
    %740 = vmatpush1.msra.mxu0 0.0
    %741 = vmatprep.subr.mxu0 0.0
    %742 = vmatpush1.msra.mxu0 0.0
    %743 = vmatprep.subr.mxu0 0.0
    %744 = vmatpush1.msra.mxu0 0.0
    %745 = vmatprep.subr.mxu0 0.0
    %746 = vmatpush1.msra.mxu0 0.0
    %747 = vmatprep.subr.mxu0 0.0
    %748 = vmatpush1.msra.mxu0 0.0
    %749 = vmatprep.subr.mxu0 0.0
    %750 = vmatpush1.msra.mxu0 0.0
    %751 = vmatprep.subr.mxu0 0.0
    %752 = vmatpush1.msra.mxu0 0.0
    %753 = vmatprep.subr.mxu0 0.0
    %754 = vmatpush1.msra.mxu0 0.0
    %755 = vmatprep.subr.mxu0 0.0
    %756 = vmatpush1.msra.mxu0 0.0
    %757 = vmatprep.subr.mxu0 0.0
    %758 = vmatpush1.msra.mxu0 0.0
    %759 = vmatprep.subr.mxu0 0.0
    %760 = vmatpush1.msra.mxu0 0.0
    %761 = vmatprep.subr.mxu0 0.0
    %762 = vmatpush1.msra.mxu0 0.0
    %763 = vmatprep.subr.mxu0 0.0
    %764 = vmatpush1.msra.mxu0 0.0
    %765 = vmatprep.subr.mxu0 0.0
    %766 = vmatpush1.msra.mxu0 0.0
    %767 = vmatprep.subr.mxu0 0.0
    %768 = vmatpush1.msra.mxu0 0.0
    %769 = vmatprep.subr.mxu0 0.0
    %770 = vmatpush1.msra.mxu0 0.0
    %771 = vmatprep.subr.mxu0 0.0
    %772 = vmatpush1.msra.mxu0 0.0
    %773 = vmatprep.subr.mxu0 0.0
    %774 = vmatpush1.msra.mxu0 0.0
    %775 = vmatprep.subr.mxu0 0.0
    %776 = vmatpush1.msra.mxu0 0.0
    %777 = vmatprep.subr.mxu0 0.0
    %778 = vmatpush1.msra.mxu0 0.0
    %779 = vmatprep.subr.mxu0 0.0
    %780 = vmatpush1.msra.mxu0 0.0
    %781 = vmatprep.subr.mxu0 0.0
    %782 = vmatpush1.msra.mxu0 0.0
    %783 = vmatprep.mubr.f32.mxu0 0.0
    %784 = vmatmul.mubr.f32.gmra.mrb[0].mxu0 %v424
    %v785 = vpop.f32.mrb[0].mxu0
    %v786 = vadd.f32 0.0, %v785
    %v787 = vpop.f32.mrb[0].mxu0
    %788 = vdwg.mxu0
    %v789 = vadd.f32 %v714, %v786
    %v790 = vld [vmem:[%s2 + $0xe0] sm:$0xff]
    %v791 = vld [vmem:[%s2 + $0xe8] sm:$0xff]
    %v793 = vsel %vm107, %v572, 0
    %795 = vmatprep.subr.mxu0 0.0
    %796 = vmatpush1.msra.mxu0 %v790
    %797 = vmatprep.subr.mxu0 0.0
    %798 = vmatpush1.msra.mxu0 %v791
    %799 = vmatprep.subr.mxu0 0.0
    %800 = vmatpush1.msra.mxu0 0.0
    %801 = vmatprep.subr.mxu0 0.0
    %802 = vmatpush1.msra.mxu0 0.0
    %803 = vmatprep.subr.mxu0 0.0
    %804 = vmatpush1.msra.mxu0 0.0
    %805 = vmatprep.subr.mxu0 0.0
    %806 = vmatpush1.msra.mxu0 0.0
    %807 = vmatprep.subr.mxu0 0.0
    %808 = vmatpush1.msra.mxu0 0.0
    %809 = vmatprep.subr.mxu0 0.0
    %810 = vmatpush1.msra.mxu0 0.0
    %811 = vmatprep.subr.mxu0 0.0
    %812 = vmatpush1.msra.mxu0 0.0
    %813 = vmatprep.subr.mxu0 0.0
    %814 = vmatpush1.msra.mxu0 0.0
    %815 = vmatprep.subr.mxu0 0.0
    %816 = vmatpush1.msra.mxu0 0.0
    %817 = vmatprep.subr.mxu0 0.0
    %818 = vmatpush1.msra.mxu0 0.0
    %819 = vmatprep.subr.mxu0 0.0
    %820 = vmatpush1.msra.mxu0 0.0
    %821 = vmatprep.subr.mxu0 0.0
    %822 = vmatpush1.msra.mxu0 0.0
    %823 = vmatprep.subr.mxu0 0.0
    %824 = vmatpush1.msra.mxu0 0.0
    %825 = vmatprep.subr.mxu0 0.0
    %826 = vmatpush1.msra.mxu0 0.0
    %827 = vmatprep.subr.mxu0 0.0
    %828 = vmatpush1.msra.mxu0 0.0
    %829 = vmatprep.subr.mxu0 0.0
    %830 = vmatpush1.msra.mxu0 0.0
    %831 = vmatprep.subr.mxu0 0.0
    %832 = vmatpush1.msra.mxu0 0.0
    %833 = vmatprep.subr.mxu0 0.0
    %834 = vmatpush1.msra.mxu0 0.0
    %835 = vmatprep.subr.mxu0 0.0
    %836 = vmatpush1.msra.mxu0 0.0
    %837 = vmatprep.subr.mxu0 0.0
    %838 = vmatpush1.msra.mxu0 0.0
    %839 = vmatprep.subr.mxu0 0.0
    %840 = vmatpush1.msra.mxu0 0.0
    %841 = vmatprep.subr.mxu0 0.0
    %842 = vmatpush1.msra.mxu0 0.0
    %843 = vmatprep.subr.mxu0 0.0
    %844 = vmatpush1.msra.mxu0 0.0
    %845 = vmatprep.subr.mxu0 0.0
    %846 = vmatpush1.msra.mxu0 0.0
    %847 = vmatprep.subr.mxu0 0.0
    %848 = vmatpush1.msra.mxu0 0.0
    %849 = vmatprep.subr.mxu0 0.0
    %850 = vmatpush1.msra.mxu0 0.0
    %851 = vmatprep.subr.mxu0 0.0
    %852 = vmatpush1.msra.mxu0 0.0
    %853 = vmatprep.subr.mxu0 0.0
    %854 = vmatpush1.msra.mxu0 0.0
    %855 = vmatprep.subr.mxu0 0.0
    %856 = vmatpush1.msra.mxu0 0.0
    %857 = vmatprep.subr.mxu0 0.0
    %858 = vmatpush1.msra.mxu0 0.0
    %859 = vmatprep.mubr.f32.mxu0 0.0
    %860 = vmatmul.mubr.f32.gmra.mrb[0].mxu0 %v793
    %v861 = vpop.f32.mrb[0].mxu0
    %v862 = vadd.f32 0.0, %v861
    %v863 = vpop.f32.mrb[0].mxu0
    %864 = vdwg.mxu0
    %v865 = vadd.f32 %v789, %v862
    %v866 = vld [vmem:[%s2 + $0x110] sm:$0x1]
    %v867 = vlaneseq
    %v868 = vshrl.u32 %v867, 7
    %v869 = vsub.s32 0, %v868
    %v870 = vrot.slane %v866, %v869
    %v871 = vadd.f32 %v865, %v870
    %vm872 = vcmask 80896
    %873 = vst.msk [vmem:[#allocation2] sm:$0xff] %vm872, %v871
    // Predicated region
    $region14: #{tpu_custom_call.1} parent=1 // pred_check
      _
    $region15: #{tpu_custom_call.1} parent=1 // pred_check_branch
      %875 = sbr.rel (0) target = $region17
    $region16: #{tpu_custom_call.1} parent=1 // pred_region
      %s877 = ssub.s32 128, 128
      %878 = vsyncadd [#allocation3], %s877
      %s880 = sshll.u32 [#allocation2], 4
      %s881 = int_to_ptr.vmem [resolvable:$true] %s880
      %883 = dma.vmem_to_hbm [thread:$0]  %s881, 128, %s3, [#allocation3]
    $region17: #{tpu_custom_call.1} parent=1 // pred_fallthru
      _
    // Predicated region
    $region18: #{tpu_custom_call.1} parent=1 // pred_check
      _
    $region19: #{tpu_custom_call.1} parent=1 // pred_check_branch
      %885 = sbr.rel (0) target = $region21
    $region20: #{tpu_custom_call.1} parent=1 // pred_region
      %886 = dma.done [#allocation3], 128
    $region21: #{tpu_custom_call.1} parent=1 // pred_fallthru
      _
    %887 = vsyncpa [#allocation3], 1

</llo_original>
